<compile_context>
chip_gen: v7x
topology: tpu7x:2x2x1
jax: 0.10.0
libtpu: 0.0.40
codegen_flags: <defaults>
</compile_context>

<pallas_src>
import math
import jax
import jax.numpy as jnp
from jax.experimental import pallas as pl
from jax.experimental.pallas import tpu as pltpu


def _cdiv(a, b):
    return (a + b - 1) // b


def _round_up(a, b):
    return _cdiv(a, b) * b


def _pad2(a, rows, cols):
    pr, pc = rows - a.shape[0], cols - a.shape[1]
    if pr or pc:
        a = jnp.pad(a, ((0, pr), (0, pc)))
    return a


# ---------------------------------------------------------------------------
# Kernels
# ---------------------------------------------------------------------------
def ffn_kernel_inplace(x_ref, w1_ref, b1_ref, w2_ref, b2_ref, o_ref):
    """f32 output: accumulate partial W2 products directly into the resident
    output block (block index constant over the hidden grid axis)."""
    h = pl.program_id(1)

    @pl.when(h == 0)
    def _():
        o_ref[...] = jnp.broadcast_to(b2_ref[...], o_ref.shape)

    hid = jnp.dot(x_ref[...], w1_ref[...], preferred_element_type=jnp.float32)
    hid = jnp.maximum(hid + b1_ref[...], 0.0)                 # ReLU in f32
    o_ref[...] += jnp.dot(hid.astype(w2_ref.dtype), w2_ref[...],
                          preferred_element_type=jnp.float32)


def ffn_kernel_scratch(x_ref, w1_ref, b1_ref, w2_ref, b2_ref, o_ref, acc_ref):
    """Non-f32 output: f32 scratch accumulator, bias+cast on the last tile."""
    h = pl.program_id(1)

    @pl.when(h == 0)
    def _():
        acc_ref[...] = jnp.zeros_like(acc_ref)

    hid = jnp.dot(x_ref[...], w1_ref[...], preferred_element_type=jnp.float32)
    hid = jnp.maximum(hid + b1_ref[...], 0.0)
    acc_ref[...] += jnp.dot(hid.astype(w2_ref.dtype), w2_ref[...],
                            preferred_element_type=jnp.float32)

    @pl.when(h == pl.num_programs(1) - 1)
    def _():
        o_ref[...] = (acc_ref[...] + b2_ref[...]).astype(o_ref.dtype)


# ---------------------------------------------------------------------------
# Tile selection / VMEM budgeting
# ---------------------------------------------------------------------------
def _vmem_capacity_bytes():
    try:
        return int(pltpu.get_tpu_info().vmem_capacity_bytes)
    except Exception:
        return 64 << 20          # conservative fallback (v7x per-TC VMEM)


def _vmem_footprint(tm, th, Dp, out_itemsize, use_acc):
    dbuf = 2 * (tm * Dp * 2                 # x tile (bf16), double buffered
                + Dp * th * 2               # W1 slab (bf16)
                + 8 * th * 4                # b1 (padded to 8 sublanes, f32)
                + th * Dp * 2               # W2 slab (bf16)
                + 8 * Dp * 4                # b2 (f32)
                + tm * Dp * out_itemsize)   # output tile
    hid_tmp = tm * th * 6                   # hidden intermediate f32 + bf16 cast
    acc = tm * Dp * 4 if use_acc else 0
    return dbuf + hid_tmp + acc


def _choose_tiles(M, Dp, H128, out_itemsize, use_acc, budget, tm_req, th_req):
    # Row tile: 16-aligned (bf16 sublane packing), amortizes weight streaming.
    tm = min(tm_req, _round_up(M, 16))
    # Keep >=2 steps on the parallel grid axis when there is enough work
    # (megacore on v5e/v6e, 2 TensorCores on v7x).
    if M >= 32 and _round_up(M, tm) // tm < 2:
        tm = max(16, _round_up(_cdiv(M, 2), 16))
    # Hidden tiles: multiples of 128 that divide H128 -> zero hidden padding.
    th_cands = [c for c in range(min(th_req, H128), 127, -128) if H128 % c == 0]
    while True:
        for th in th_cands:
            if _vmem_footprint(tm, th, Dp, out_itemsize, use_acc) <= budget:
                return tm, th
        if tm <= 128:
            return tm, th_cands[-1]          # best effort (th == 128)
        tm = max(128, _round_up(tm // 2, 16))


# ---------------------------------------------------------------------------
# Parameter prep (hoisted out of the per-call hot path)
# ---------------------------------------------------------------------------
def prepare_params(w1, b1, w2, b2):
    """One-time weight prep: bf16 cast + 128-alignment padding.
    Weights are stored as (in_features, out_features): y = relu(x@W1+b1)@W2+b2."""
    D, H = w1.shape
    Dp, H128 = _round_up(D, 128), _round_up(H, 128)
    w1p = _pad2(w1.astype(jnp.bfloat16), Dp, H128)
    b1p = _pad2(b1.reshape(1, H).astype(jnp.float32), 1, H128)
    w2p = _pad2(w2.astype(jnp.bfloat16), H128, Dp)
    b2p = _pad2(b2.reshape(1, D).astype(jnp.float32), 1, Dp)
    return (w1p, b1p, w2p, b2p, D, H)


# ---------------------------------------------------------------------------
# Forward wrapper
# ---------------------------------------------------------------------------
def feed_forward(x, params, *, tm=None, th=None):
    """FeedForward W2(relu(W1(x))).  x: (B, S, D) -> (B, S, D)."""
    w1p, b1p, w2p, b2p, D, H = params
    B, S, Dx = x.shape
    assert Dx == D, f"x feature dim {Dx} != weight in_features {D}"
    Dp, H128 = w1p.shape
    M = B * S
    out_dtype = x.dtype
    out_itemsize = jnp.dtype(out_dtype).itemsize
    use_acc = out_dtype != jnp.float32      # f32 output accumulates in-place

    vmem_cap = _vmem_capacity_bytes()
    budget = int(vmem_cap * 0.80)

    tm_req = tm if tm is not None else (
        1024 if (vmem_cap >= (96 << 20) and M >= 4096) else 512)
    tm_req = max(16, _round_up(tm_req, 16))
    th_req = max(128, _round_up(th if th is not None else 1024, 128))

    tm_eff, th_eff = _choose_tiles(M, Dp, H128, out_itemsize, use_acc,
                                   budget, tm_req, th_req)
    Mp = _round_up(M, tm_eff)
    Hp = H128                               # th_eff divides H128: no extra pad

    # Per-call x prep only (weights already prepared/cast once).
    x2d = _pad2(x.reshape(M, D).astype(jnp.bfloat16), Mp, Dp)

    grid = (Mp // tm_eff, Hp // th_eff)
    n_row_tiles = grid[0]

    footprint = _vmem_footprint(tm_eff, th_eff, Dp, out_itemsize, use_acc)
    vmem_limit = min(int(vmem_cap * 0.90), max(32 << 20, int(footprint * 1.25)))

    cost = pl.CostEstimate(
        flops=4 * Mp * Dp * Hp,             # two matmuls, 2*M*K*N each
        transcendentals=0,
        bytes_accessed=(Mp * Dp * 2                         # x (bf16)
                        + n_row_tiles * 2 * (Dp * Hp * 2)   # W1+W2 re-streamed per row tile
                        + 4 * Hp + 4 * Dp                   # biases
                        + Mp * Dp * out_itemsize),          # output
    )

    if use_acc:
        kernel = ffn_kernel_scratch
        scratch_shapes = [pltpu.VMEM((tm_eff, Dp), jnp.float32)]
    else:
        kernel = ffn_kernel_inplace
        scratch_shapes = []

    out2d = pl.pallas_call(
        kernel,
        out_shape=jax.ShapeDtypeStruct((Mp, Dp), out_dtype),
        grid_spec=pltpu.PrefetchScalarGridSpec(
            num_scalar_prefetch=0,
            grid=grid,
            in_specs=[
                pl.BlockSpec((tm_eff, Dp), lambda i, h: (i, 0)),   # x tile (constant over h)
                pl.BlockSpec((Dp, th_eff), lambda i, h: (0, h)),   # W1 slab streams over H
                pl.BlockSpec((1, th_eff), lambda i, h: (0, h)),    # b1 slab
                pl.BlockSpec((th_eff, Dp), lambda i, h: (h, 0)),   # W2 slab streams over H
                pl.BlockSpec((1, Dp), lambda i, h: (0, 0)),        # b2
            ],
            out_specs=pl.BlockSpec((tm_eff, Dp), lambda i, h: (i, 0)),
            scratch_shapes=scratch_shapes,
        ),
        compiler_params=pltpu.CompilerParams(
            dimension_semantics=("parallel", "arbitrary"),
            vmem_limit_bytes=vmem_limit),
        cost_estimate=cost,
    )(x2d, w1p, b1p, w2p, b2p)

    return out2d[:M, :D].reshape(B, S, D)


def init_params(key, embedding_dim):
    """Deterministic init mimicking nn.Linear's uniform(-1/sqrt(fan_in), +)."""
    ff_hidden_dim = embedding_dim * 2
    k1, k2, k3, k4 = jax.random.split(key, 4)
    bound1 = 1.0 / math.sqrt(embedding_dim)
    bound2 = 1.0 / math.sqrt(ff_hidden_dim)
    # stored as (in, out) so the kernel uses x @ W directly
    w1 = jax.random.uniform(k1, (embedding_dim, ff_hidden_dim), jnp.float32,
                            -bound1, bound1)
    b1 = jax.random.uniform(k2, (ff_hidden_dim,), jnp.float32, -bound1, bound1)
    w2 = jax.random.uniform(k3, (ff_hidden_dim, embedding_dim), jnp.float32,
                            -bound2, bound2)
    b2 = jax.random.uniform(k4, (embedding_dim,), jnp.float32, -bound2, bound2)
    return w1, b1, w2, b2


if __name__ == "__main__":
    key = jax.random.PRNGKey(0)
    kx, kp, kx2, kp2 = jax.random.split(key, 4)

    # ---- small shape matching the module defaults ------------------------
    batch, seq, embedding_dim = 2, 8, 32          # ff_hidden_dim = 64
    x = jax.random.normal(kx, (batch, seq, embedding_dim), jnp.float32)
    w1, b1, w2, b2 = init_params(kp, embedding_dim)
    params = prepare_params(w1, b1, w2, b2)

    out = jax.block_until_ready(feed_forward(x, params))
    assert out.shape == (batch, seq, embedding_dim)

    # f32 reference (loose tolerance: kernel uses bf16 MXU operands)
    ref32 = jnp.maximum(x @ w1 + b1, 0.0) @ w2 + b2
    # bf16-operand / f32-accumulation reference (tighter tolerance)
    xb, w1b, w2b = (a.astype(jnp.bfloat16) for a in (x, w1, w2))
    hb = jnp.maximum(jnp.dot(xb.reshape(-1, embedding_dim), w1b,
                             preferred_element_type=jnp.float32) + b1, 0.0)
    refb = (jnp.dot(hb.astype(jnp.bfloat16), w2b,
                    preferred_element_type=jnp.float32) + b2).reshape(out.shape)
    assert jnp.allclose(out, ref32, atol=1e-1, rtol=1e-1)
    assert jnp.allclose(out, refb, atol=1e-2, rtol=1e-2)

    # ---- slightly larger shape: exercises >=2 row tiles on the parallel
    #      axis and >=2 hidden tiles (in-place accumulation over h) ---------
    batch2, seq2, dim2 = 4, 128, 128              # M=512, H=256
    x2 = jax.random.normal(kx2, (batch2, seq2, dim2), jnp.float32)
    w1_2, b1_2, w2_2, b2_2 = init_params(kp2, dim2)
    params2 = prepare_params(w1_2, b1_2, w2_2, b2_2)
    out2 = jax.block_until_ready(feed_forward(x2, params2, th=128))
    assert out2.shape == (batch2, seq2, dim2)

    xb2, w1b2, w2b2 = (a.astype(jnp.bfloat16) for a in (x2, w1_2, w2_2))
    hb2 = jnp.maximum(jnp.dot(xb2.reshape(-1, dim2), w1b2,
                              preferred_element_type=jnp.float32) + b1_2, 0.0)
    refb2 = (jnp.dot(hb2.astype(jnp.bfloat16), w2b2,
                     preferred_element_type=jnp.float32) + b2_2).reshape(out2.shape)
    assert jnp.allclose(out2, refb2, atol=2e-2, rtol=2e-2)

    print("KERNEL_OK")
</pallas_src>

<mosaic_0001>
module attributes {stable_mosaic.version = 11 : i64} {
  func.func @ffn_kernel_inplace(%arg0: i32, %arg1: i32, %arg2: memref<16x128xbf16, #tpu.memory_space<vmem>>, %arg3: memref<128x128xbf16, #tpu.memory_space<vmem>>, %arg4: memref<1x128xf32, #tpu.memory_space<vmem>>, %arg5: memref<128x128xbf16, #tpu.memory_space<vmem>>, %arg6: memref<1x128xf32, #tpu.memory_space<vmem>>, %arg7: memref<16x128xf32, #tpu.memory_space<vmem>>) attributes {dimension_semantics = [#tpu.dimension_semantics<parallel>, #tpu.dimension_semantics<arbitrary>], iteration_bounds = array<i64: 1, 1>, scalar_prefetch = 0 : i64, scratch_operands = 0 : i64, tpu.core_type = #tpu.core_type<tc>, window_params = [{transform_indices = @transform_0, window_bounds = array<i64: 16, 128>}, {transform_indices = @transform_1, window_bounds = array<i64: 128, 128>}, {transform_indices = @transform_2, window_bounds = array<i64: 1, 128>}, {transform_indices = @transform_3, window_bounds = array<i64: 128, 128>}, {pipeline_mode = #tpu.pipeline_mode<synchronous>, transform_indices = @transform_4, window_bounds = array<i64: 1, 128>}, {transform_indices = @transform_5, window_bounds = array<i64: 16, 128>}]} {
    %c0_i32 = arith.constant 0 : i32
    %0 = arith.cmpi eq, %arg1, %c0_i32 : i32
    %1 = arith.extui %0 : i1 to i32
    %c0_i32_0 = arith.constant 0 : i32
    %2 = arith.cmpi ne, %1, %c0_i32_0 : i32
    scf.if %2 {
      %c0_14 = arith.constant 0 : index
      %c0_15 = arith.constant 0 : index
      %17 = vector.load %arg6[%c0_14, %c0_15] : memref<1x128xf32, #tpu.memory_space<vmem>>, vector<1x128xf32>
      %18 = vector.shape_cast %17 : vector<1x128xf32> to vector<1x128xf32>
      %19 = vector.broadcast %18 : vector<1x128xf32> to vector<16x128xf32>
      %c0_16 = arith.constant 0 : index
      %c0_17 = arith.constant 0 : index
      %20 = vector.load %arg7[%c0_16, %c0_17] : memref<16x128xf32, #tpu.memory_space<vmem>>, vector<16x128xf32>
      tpu.vector_store %arg7[%c0_16, %c0_17], %19 {strides = array<i32>} : memref<16x128xf32, #tpu.memory_space<vmem>>, vector<16x128xf32>,
    } else {
    }
    %c0 = arith.constant 0 : index
    %c0_1 = arith.constant 0 : index
    %3 = vector.load %arg2[%c0, %c0_1] : memref<16x128xbf16, #tpu.memory_space<vmem>>, vector<16x128xbf16>
    %c0_2 = arith.constant 0 : index
    %c0_3 = arith.constant 0 : index
    %4 = vector.load %arg3[%c0_2, %c0_3] : memref<128x128xbf16, #tpu.memory_space<vmem>>, vector<128x128xbf16>
    %cst = arith.constant dense<0.000000e+00> : vector<16x128xf32>
    %5 = tpu.matmul %3, %4, %cst {dimension_numbers = #tpu.dot_dimension_numbers<[1], [0], [0], [1], [0, 0, 1, 1], [], []>} : vector<16x128xbf16>, vector<128x128xbf16>, vector<16x128xf32> -> vector<16x128xf32>
    %c0_4 = arith.constant 0 : index
    %c0_5 = arith.constant 0 : index
    %6 = vector.load %arg4[%c0_4, %c0_5] : memref<1x128xf32, #tpu.memory_space<vmem>>, vector<1x128xf32>
    %7 = vector.broadcast %6 : vector<1x128xf32> to vector<16x128xf32>
    %8 = arith.addf %5, %7 : vector<16x128xf32>
    %cst_6 = arith.constant 0.000000e+00 : f32
    %9 = vector.broadcast %cst_6 : f32 to vector<16x128xf32>
    %10 = arith.maximumf %8, %9 : vector<16x128xf32>
    %c0_7 = arith.constant 0 : index
    %c0_8 = arith.constant 0 : index
    %11 = vector.load %arg7[%c0_7, %c0_8] : memref<16x128xf32, #tpu.memory_space<vmem>>, vector<16x128xf32>
    %12 = arith.truncf %10 : vector<16x128xf32> to vector<16x128xbf16>
    %c0_9 = arith.constant 0 : index
    %c0_10 = arith.constant 0 : index
    %13 = vector.load %arg5[%c0_9, %c0_10] : memref<128x128xbf16, #tpu.memory_space<vmem>>, vector<128x128xbf16>
    %cst_11 = arith.constant dense<0.000000e+00> : vector<16x128xf32>
    %14 = tpu.matmul %12, %13, %cst_11 {dimension_numbers = #tpu.dot_dimension_numbers<[1], [0], [0], [1], [0, 0, 1, 1], [], []>} : vector<16x128xbf16>, vector<128x128xbf16>, vector<16x128xf32> -> vector<16x128xf32>
    %15 = arith.addf %11, %14 : vector<16x128xf32>
    %c0_12 = arith.constant 0 : index
    %c0_13 = arith.constant 0 : index
    %16 = vector.load %arg7[%c0_12, %c0_13] : memref<16x128xf32, #tpu.memory_space<vmem>>, vector<16x128xf32>
    tpu.vector_store %arg7[%c0_12, %c0_13], %15 {strides = array<i32>} : memref<16x128xf32, #tpu.memory_space<vmem>>, vector<16x128xf32>,
    return
  }
  func.func @transform_0(%arg0: i32, %arg1: i32) -> (i32, i32) {
    %c0_i32 = arith.constant 0 : i32
    %c0_i32_0 = arith.constant 0 : i32
    return %arg0, %c0_i32 : i32, i32
  }
  func.func @transform_1(%arg0: i32, %arg1: i32) -> (i32, i32) {
    %c0_i32 = arith.constant 0 : i32
    %c0_i32_0 = arith.constant 0 : i32
    return %c0_i32, %arg1 : i32, i32
  }
  func.func @transform_2(%arg0: i32, %arg1: i32) -> (i32, i32) {
    %c0_i32 = arith.constant 0 : i32
    %c0_i32_0 = arith.constant 0 : i32
    return %c0_i32, %arg1 : i32, i32
  }
  func.func @transform_3(%arg0: i32, %arg1: i32) -> (i32, i32) {
    %c0_i32 = arith.constant 0 : i32
    %c0_i32_0 = arith.constant 0 : i32
    return %arg1, %c0_i32 : i32, i32
  }
  func.func @transform_4(%arg0: i32, %arg1: i32) -> (i32, i32) {
    %c0_i32 = arith.constant 0 : i32
    %c0_i32_0 = arith.constant 0 : i32
    %c0_i32_1 = arith.constant 0 : i32
    return %c0_i32, %c0_i32_0 : i32, i32
  }
  func.func @transform_5(%arg0: i32, %arg1: i32) -> (i32, i32) {
    %c0_i32 = arith.constant 0 : i32
    %c0_i32_0 = arith.constant 0 : i32
    return %arg0, %c0_i32 : i32, i32
  }
}

</mosaic_0001>

<llo_original>
// kernel: tpu_custom_call.1
$region0: #{tpu_custom_call.1}
  #allocation0 [shape = 'u32[]', space=smem, size = 0x4, offset = 0x4, fixed_abs, tag = 'smem constant byte address 0x4 - core index']
  #allocation1 [shape = 'u32[144,128]{1,0:T(1,128)}', space=vmem, size = 0x12000, scoped, tag = 'internal scratch']
  %s0 = inlined_call_operand.hbm [shape: bf16[16,128], index: 0, kind: input, shape index: {}]
  %s1 = inlined_call_operand.hbm [shape: bf16[128,128], index: 1, kind: input, shape index: {}]
  %s2 = inlined_call_operand.vmem [shape: f32[1,128], index: 2, kind: input, shape index: {}]
  %s3 = inlined_call_operand.hbm [shape: bf16[128,128], index: 3, kind: input, shape index: {}]
  %s4 = inlined_call_operand.vmem [shape: f32[1,128], index: 4, kind: input, shape index: {}]
  %s5 = inlined_call_operand.hbm [shape: f32[16,128], index: 5, kind: output, shape index: {}]
  %s6 = sld [smem:[#allocation0]]
  $region46: #{tpu_custom_call.1} parent=0
    _
  %s8 = ssub.s32 1, %s6
  %s9 = scalar_select 0, %s8, %s6
  $region1: #{tpu_custom_call.1} parent=0
    #allocation2 [shape = 'u8[4096]{0}', space=vmem, size = 0x1000, scoped, tag = 'input window, operand 0, single buffered']
    #allocation3 [shape = 's32[1]{0}', space=sflag, size = 0x4, scoped, tag = 'scoped memory for tpu_custom_call.1']
    #allocation4 [shape = 's32[1]{0}', space=sflag, size = 0x4, scoped, tag = 'scoped memory for tpu_custom_call.1']
    #allocation5 [shape = 'u8[32768]{0}', space=vmem, size = 0x8000, scoped, tag = 'input window, operand 1, single buffered']
    #allocation6 [shape = 's32[1]{0}', space=sflag, size = 0x4, scoped, tag = 'scoped memory for tpu_custom_call.1']
    #allocation7 [shape = 'u8[32768]{0}', space=vmem, size = 0x8000, scoped, tag = 'input window, operand 3, single buffered']
    #allocation8 [shape = 'u8[8192]{0}', space=vmem, size = 0x2000, scoped, tag = 'output window, operand 0, single buffered']
    %10 = vsyncpa [#allocation3], 0
    %11 = vsyncpa [#allocation6], 0
    %12 = vsyncpa [#allocation4], 0
    // Predicated region
    $region2: #{tpu_custom_call.1} parent=1 // pred_check
      _
    $region3: #{tpu_custom_call.1} parent=1 // pred_check_branch
      %14 = sbr.rel (0) target = $region5
    $region4: #{tpu_custom_call.1} parent=1 // pred_region
      %s16 = ssub.s32 128, 128
      %17 = vsyncadd [#allocation3], %s16
      %s18 = sshll.u32 [#allocation2], 4
      %s19 = int_to_ptr.vmem [resolvable:$true] %s18
      %24 = dma.hbm_to_vmem [thread:$0]  %s0, 128, %s19, [#allocation3], 64, 64, 4
    $region5: #{tpu_custom_call.1} parent=1 // pred_fallthru
      _
    // Predicated region
    $region6: #{tpu_custom_call.1} parent=1 // pred_check
      _
    $region7: #{tpu_custom_call.1} parent=1 // pred_check_branch
      %26 = sbr.rel (0) target = $region9
    $region8: #{tpu_custom_call.1} parent=1 // pred_region
      %s28 = ssub.s32 1024, 1024
      %29 = vsyncadd [#allocation6], %s28
      %s30 = sshll.u32 [#allocation5], 4
      %s31 = int_to_ptr.vmem [resolvable:$true] %s30
      %36 = dma.hbm_to_vmem [thread:$0]  %s1, 1024, %s31, [#allocation6], 64, 64, 4
    $region9: #{tpu_custom_call.1} parent=1 // pred_fallthru
      _
    // Predicated region
    $region10: #{tpu_custom_call.1} parent=1 // pred_check
      _
    $region11: #{tpu_custom_call.1} parent=1 // pred_check_branch
      %38 = sbr.rel (0) target = $region13
    $region12: #{tpu_custom_call.1} parent=1 // pred_region
      _
    $region13: #{tpu_custom_call.1} parent=1 // pred_fallthru
      _
    // Predicated region
    $region14: #{tpu_custom_call.1} parent=1 // pred_check
      _
    $region15: #{tpu_custom_call.1} parent=1 // pred_check_branch
      %40 = sbr.rel (0) target = $region17
    $region16: #{tpu_custom_call.1} parent=1 // pred_region
      %s42 = ssub.s32 1024, 1024
      %43 = vsyncadd [#allocation6], %s42
      %s44 = sshll.u32 [#allocation7], 4
      %s45 = int_to_ptr.vmem [resolvable:$true] %s44
      %50 = dma.hbm_to_vmem [thread:$0]  %s3, 1024, %s45, [#allocation6], 64, 64, 4
    $region17: #{tpu_custom_call.1} parent=1 // pred_fallthru
      _
    // Predicated region
    $region18: #{tpu_custom_call.1} parent=1 // pred_check
      _
    $region19: #{tpu_custom_call.1} parent=1 // pred_check_branch
      %52 = sbr.rel (0) target = $region21
    $region20: #{tpu_custom_call.1} parent=1 // pred_region
      _
    $region21: #{tpu_custom_call.1} parent=1 // pred_fallthru
      _
    // Predicated region
    $region22: #{tpu_custom_call.1} parent=1 // pred_check
      _
    $region23: #{tpu_custom_call.1} parent=1 // pred_check_branch
      %54 = sbr.rel (0) target = $region25
    $region24: #{tpu_custom_call.1} parent=1 // pred_region
      %55 = dma.done [#allocation3], 128
    $region25: #{tpu_custom_call.1} parent=1 // pred_fallthru
      _
    // Predicated region
    $region26: #{tpu_custom_call.1} parent=1 // pred_check
      _
    $region27: #{tpu_custom_call.1} parent=1 // pred_check_branch
      %57 = sbr.rel (0) target = $region29
    $region28: #{tpu_custom_call.1} parent=1 // pred_region
      %58 = dma.done [#allocation6], 1024
    $region29: #{tpu_custom_call.1} parent=1 // pred_fallthru
      _
    // Predicated region
    $region30: #{tpu_custom_call.1} parent=1 // pred_check
      _
    $region31: #{tpu_custom_call.1} parent=1 // pred_check_branch
      %60 = sbr.rel (0) target = $region33
    $region32: #{tpu_custom_call.1} parent=1 // pred_region
      %61 = dma.done [#allocation6], 1024
    $region33: #{tpu_custom_call.1} parent=1 // pred_fallthru
      _
    %p63 = scmp.eq.s32.totalorder 0, 0
    // Predicated region
    $region34: #{tpu_custom_call.1} parent=1 // pred_check
      %p64 = pneg %p63
    $region35: #{tpu_custom_call.1} parent=1 // pred_check_branch
      %66 = sbr.rel (%p64) target = $region37
    $region36: #{tpu_custom_call.1} parent=1 // pred_region
      %v67 = vld [vmem:[%s4] sm:$0x1]
      %v69 = vlaneseq
      %v70 = vshrl.u32 %v69, 7
      %v71 = vsub.s32 0, %v70
      %v72 = vrot.slane %v67, %v71
      %74 = vst [vmem:[#allocation8] sm:$0xff] %v72
      %75 = vst [vmem:[#allocation8 + $0x8] sm:$0xff] %v72
    $region37: #{tpu_custom_call.1} parent=1 // pred_fallthru
      _
    %v76 = vld [vmem:[#allocation2] sm:$0xf]
    %v77 = vld [vmem:[#allocation2 + $0x4] sm:$0xf]
    %v78 = vld [vmem:[#allocation5] sm:$0xf]
    %v79 = vld [vmem:[#allocation5 + $0x4] sm:$0xf]
    %v80 = vld [vmem:[#allocation5 + $0x8] sm:$0xf]
    %v81 = vld [vmem:[#allocation5 + $0xc] sm:$0xf]
    %v82 = vld [vmem:[#allocation5 + $0x10] sm:$0xf]
    %v83 = vld [vmem:[#allocation5 + $0x14] sm:$0xf]
    %v84 = vld [vmem:[#allocation5 + $0x18] sm:$0xf]
    %v85 = vld [vmem:[#allocation5 + $0x1c] sm:$0xf]
    %v86 = vld [vmem:[#allocation5 + $0x20] sm:$0xf]
    %v87 = vld [vmem:[#allocation5 + $0x24] sm:$0xf]
    %v88 = vld [vmem:[#allocation5 + $0x28] sm:$0xf]
    %v89 = vld [vmem:[#allocation5 + $0x2c] sm:$0xf]
    %v90 = vld [vmem:[#allocation5 + $0x30] sm:$0xf]
    %v91 = vld [vmem:[#allocation5 + $0x34] sm:$0xf]
    %v92 = vld [vmem:[#allocation5 + $0x38] sm:$0xf]
    %v93 = vld [vmem:[#allocation5 + $0x3c] sm:$0xf]
    %v94 = vld [vmem:[%s2] sm:$0x1]
    %v96 = vlaneseq
    %v97 = vshrl.u32 %v96, 7
    %v98 = vsub.s32 0, %v97
    %v99 = vrot.slane %v94, %v98
    %v103 = vunpack.c.l.b16 %v76
    %v104 = vunpack.c.l.b16 %v77
    %v105 = vpack.c.b16 %v104, %v103
    %v123 = vunpack.c.l.b16 %v78
    %v124 = vunpack.c.l.b16 %v79
    %v125 = vunpack.c.l.b16 %v80
    %v126 = vunpack.c.l.b16 %v81
    %v127 = vunpack.c.l.b16 %v82
    %v128 = vunpack.c.l.b16 %v83
    %v129 = vunpack.c.l.b16 %v84
    %v130 = vunpack.c.l.b16 %v85
    %v131 = vunpack.c.l.b16 %v86
    %v132 = vunpack.c.l.b16 %v87
    %v133 = vunpack.c.l.b16 %v88
    %v134 = vunpack.c.l.b16 %v89
    %v135 = vunpack.c.l.b16 %v90
    %v136 = vunpack.c.l.b16 %v91
    %v137 = vunpack.c.l.b16 %v92
    %v138 = vunpack.c.l.b16 %v93
    %v139 = vpack.c.b16 %v124, %v123
    %v140 = vpack.c.b16 %v126, %v125
    %v141 = vpack.c.b16 %v128, %v127
    %v142 = vpack.c.b16 %v130, %v129
    %v143 = vpack.c.b16 %v132, %v131
    %v144 = vpack.c.b16 %v134, %v133
    %v145 = vpack.c.b16 %v136, %v135
    %v146 = vpack.c.b16 %v138, %v137
    %155 = vmatprep.subr.bf16.mxu0 0
    %156 = vmatpush1.bf16.msra.mxu0 %v139
    %157 = vmatprep.subr.bf16.mxu0 0
    %158 = vmatpush1.bf16.msra.mxu0 %v140
    %159 = vmatprep.subr.bf16.mxu0 0
    %160 = vmatpush1.bf16.msra.mxu0 %v141
    %161 = vmatprep.subr.bf16.mxu0 0
    %162 = vmatpush1.bf16.msra.mxu0 %v142
    %163 = vmatprep.subr.bf16.mxu0 0
    %164 = vmatpush1.bf16.msra.mxu0 %v143
    %165 = vmatprep.subr.bf16.mxu0 0
    %166 = vmatpush1.bf16.msra.mxu0 %v144
    %167 = vmatprep.subr.bf16.mxu0 0
    %168 = vmatpush1.bf16.msra.mxu0 %v145
    %169 = vmatprep.subr.bf16.mxu0 0
    %170 = vmatpush1.bf16.msra.mxu0 %v146
    %171 = vmatprep.subr.bf16.mxu0 0
    %172 = vmatpush1.bf16.msra.mxu0 0
    %173 = vmatprep.subr.bf16.mxu0 0
    %174 = vmatpush1.bf16.msra.mxu0 0
    %175 = vmatprep.subr.bf16.mxu0 0
    %176 = vmatpush1.bf16.msra.mxu0 0
    %177 = vmatprep.subr.bf16.mxu0 0
    %178 = vmatpush1.bf16.msra.mxu0 0
    %179 = vmatprep.subr.bf16.mxu0 0
    %180 = vmatpush1.bf16.msra.mxu0 0
    %181 = vmatprep.subr.bf16.mxu0 0
    %182 = vmatpush1.bf16.msra.mxu0 0
    %183 = vmatprep.subr.bf16.mxu0 0
    %184 = vmatpush1.bf16.msra.mxu0 0
    %185 = vmatprep.subr.bf16.mxu0 0
    %186 = vmatpush1.bf16.msra.mxu0 0
    %187 = vmatprep.mubr.bf16.mxu0 0
    %188 = vmatmul.mubr.bf16.gmra.mrb[0].mxu0 %v105
    %v189 = vpop.f32.mrb[0].mxu0
    %v190 = vadd.f32 %v99, %v189
    %v191 = vpop.f32.mrb[0].mxu0
    %v192 = vpop.f32.mrb[0].mxu0
    %v193 = vadd.f32 %v99, %v192
    %v194 = vpop.f32.mrb[0].mxu0
    %195 = vdwg.mxu0
    %v196 = vmax.f32 %v190, 0.0
    %v197 = vmax.f32 %v193, 0.0
    %v198 = vld [vmem:[#allocation8] sm:$0xff]
    %v199 = vld [vmem:[#allocation8 + $0x8] sm:$0xff]
    %v200 = vpack.c.bf16 %v197, %v196
    %v201 = vld [vmem:[#allocation7] sm:$0xf]
    %v202 = vld [vmem:[#allocation7 + $0x4] sm:$0xf]
    %v203 = vld [vmem:[#allocation7 + $0x8] sm:$0xf]
    %v204 = vld [vmem:[#allocation7 + $0xc] sm:$0xf]
    %v205 = vld [vmem:[#allocation7 + $0x10] sm:$0xf]
    %v206 = vld [vmem:[#allocation7 + $0x14] sm:$0xf]
    %v207 = vld [vmem:[#allocation7 + $0x18] sm:$0xf]
    %v208 = vld [vmem:[#allocation7 + $0x1c] sm:$0xf]
    %v209 = vld [vmem:[#allocation7 + $0x20] sm:$0xf]
    %v210 = vld [vmem:[#allocation7 + $0x24] sm:$0xf]
    %v211 = vld [vmem:[#allocation7 + $0x28] sm:$0xf]
    %v212 = vld [vmem:[#allocation7 + $0x2c] sm:$0xf]
    %v213 = vld [vmem:[#allocation7 + $0x30] sm:$0xf]
    %v214 = vld [vmem:[#allocation7 + $0x34] sm:$0xf]
    %v215 = vld [vmem:[#allocation7 + $0x38] sm:$0xf]
    %v216 = vld [vmem:[#allocation7 + $0x3c] sm:$0xf]
    %v233 = vunpack.c.l.b16 %v201
    %v234 = vunpack.c.l.b16 %v202
    %v235 = vunpack.c.l.b16 %v203
    %v236 = vunpack.c.l.b16 %v204
    %v237 = vunpack.c.l.b16 %v205
    %v238 = vunpack.c.l.b16 %v206
    %v239 = vunpack.c.l.b16 %v207
    %v240 = vunpack.c.l.b16 %v208
    %v241 = vunpack.c.l.b16 %v209
    %v242 = vunpack.c.l.b16 %v210
    %v243 = vunpack.c.l.b16 %v211
    %v244 = vunpack.c.l.b16 %v212
    %v245 = vunpack.c.l.b16 %v213
    %v246 = vunpack.c.l.b16 %v214
    %v247 = vunpack.c.l.b16 %v215
    %v248 = vunpack.c.l.b16 %v216
    %v249 = vpack.c.b16 %v234, %v233
    %v250 = vpack.c.b16 %v236, %v235
    %v251 = vpack.c.b16 %v238, %v237
    %v252 = vpack.c.b16 %v240, %v239
    %v253 = vpack.c.b16 %v242, %v241
    %v254 = vpack.c.b16 %v244, %v243
    %v255 = vpack.c.b16 %v246, %v245
    %v256 = vpack.c.b16 %v248, %v247
    %265 = vmatprep.subr.bf16.mxu0 0
    %266 = vmatpush1.bf16.msra.mxu0 %v249
    %267 = vmatprep.subr.bf16.mxu0 0
    %268 = vmatpush1.bf16.msra.mxu0 %v250
    %269 = vmatprep.subr.bf16.mxu0 0
    %270 = vmatpush1.bf16.msra.mxu0 %v251
    %271 = vmatprep.subr.bf16.mxu0 0
    %272 = vmatpush1.bf16.msra.mxu0 %v252
    %273 = vmatprep.subr.bf16.mxu0 0
    %274 = vmatpush1.bf16.msra.mxu0 %v253
    %275 = vmatprep.subr.bf16.mxu0 0
    %276 = vmatpush1.bf16.msra.mxu0 %v254
    %277 = vmatprep.subr.bf16.mxu0 0
    %278 = vmatpush1.bf16.msra.mxu0 %v255
    %279 = vmatprep.subr.bf16.mxu0 0
    %280 = vmatpush1.bf16.msra.mxu0 %v256
    %281 = vmatprep.subr.bf16.mxu0 0
    %282 = vmatpush1.bf16.msra.mxu0 0
    %283 = vmatprep.subr.bf16.mxu0 0
    %284 = vmatpush1.bf16.msra.mxu0 0
    %285 = vmatprep.subr.bf16.mxu0 0
    %286 = vmatpush1.bf16.msra.mxu0 0
    %287 = vmatprep.subr.bf16.mxu0 0
    %288 = vmatpush1.bf16.msra.mxu0 0
    %289 = vmatprep.subr.bf16.mxu0 0
    %290 = vmatpush1.bf16.msra.mxu0 0
    %291 = vmatprep.subr.bf16.mxu0 0
    %292 = vmatpush1.bf16.msra.mxu0 0
    %293 = vmatprep.subr.bf16.mxu0 0
    %294 = vmatpush1.bf16.msra.mxu0 0
    %295 = vmatprep.subr.bf16.mxu0 0
    %296 = vmatpush1.bf16.msra.mxu0 0
    %297 = vmatprep.mubr.bf16.mxu0 0
    %298 = vmatmul.mubr.bf16.gmra.mrb[0].mxu0 %v200
    %v299 = vpop.f32.mrb[0].mxu0
    %v300 = vadd.f32 0.0, %v299
    %v301 = vpop.f32.mrb[0].mxu0
    %v302 = vpop.f32.mrb[0].mxu0
    %v303 = vadd.f32 0.0, %v302
    %v304 = vpop.f32.mrb[0].mxu0
    %305 = vdwg.mxu0
    %v306 = vadd.f32 %v198, %v300
    %v307 = vadd.f32 %v199, %v303
    %308 = vst [vmem:[#allocation8] sm:$0xff] %v306
    %309 = vst [vmem:[#allocation8 + $0x8] sm:$0xff] %v307
    // Predicated region
    $region38: #{tpu_custom_call.1} parent=1 // pred_check
      _
    $region39: #{tpu_custom_call.1} parent=1 // pred_check_branch
      %311 = sbr.rel (0) target = $region41
    $region40: #{tpu_custom_call.1} parent=1 // pred_region
      %s313 = ssub.s32 256, 256
      %314 = vsyncadd [#allocation4], %s313
      %s315 = sshll.u32 [#allocation8], 4
      %s316 = int_to_ptr.vmem [resolvable:$true] %s315
      %321 = dma.vmem_to_hbm [thread:$0]  %s316, 256, %s5, [#allocation4], 128, 128, 8
    $region41: #{tpu_custom_call.1} parent=1 // pred_fallthru
      _
    // Predicated region
    $region42: #{tpu_custom_call.1} parent=1 // pred_check
      _
    $region43: #{tpu_custom_call.1} parent=1 // pred_check_branch
      %323 = sbr.rel (0) target = $region45
    $region44: #{tpu_custom_call.1} parent=1 // pred_region
      %324 = dma.done [#allocation4], 256
    $region45: #{tpu_custom_call.1} parent=1 // pred_fallthru
      _
    %325 = vsyncpa [#allocation3], 1
    %326 = vsyncpa [#allocation6], 1
    %327 = vsyncpa [#allocation4], 1

</llo_original>
